<compile_context>
chip_gen: v7x
topology: tpu7x:2x2x1
jax: 0.10.0
libtpu: 0.0.40
codegen_flags: <defaults>
</compile_context>

<pallas_src>
import functools

import jax
import jax.numpy as jnp
import numpy as np
from jax.experimental import pallas as pl
from jax.experimental.pallas import tpu as pltpu


def _dice_kernel(seg_ref, coords_ref, tgt_ref, p_ref, out_ref, *, C, K, offs):
    """One batch per grid step: batched CondInst head over all K objects and
    all H*W pixels, then the three dice partial sums written once."""
    KC = K * C
    o_w1f, o_w1c, o_w2, o_w3, o_b2, o_b3, o_m = offs

    seg = seg_ref[0]              # (C, HW)   feature maps, pixels on lanes
    coords = coords_ref[...]      # (8, HW)   rows = [x_grid, y_grid, 1, 0...]

    # One packed, lane-dense parameter slab; static sublane-aligned slices.
    w1f = p_ref[0, o_w1f:o_w1f + KC, 0:C]     # (KC, C)
    w1c = p_ref[0, o_w1c:o_w1c + KC, 0:8]     # (KC, 8)  [W1x/W, W1y/H, c0, 0..]
    w2 = p_ref[0, o_w2:o_w2 + KC, 0:KC]       # (KC, KC) block-diagonal conv2
    w3 = p_ref[0, o_w3:o_w3 + K, 0:KC]        # (K, KC)  block conv3
    b2 = p_ref[0, o_b2:o_b2 + KC, 0:1]        # (KC, 1)
    b3 = p_ref[0, o_b3:o_b3 + K, 0:1]         # (K, 1)
    mc = p_ref[0, o_m:o_m + K, 0:1]           # (K, 1)   per-object mask

    # conv1 for all K objects at once (rel-coord + bias folded into w1c/coords).
    h1 = jnp.dot(w1f, seg, preferred_element_type=jnp.float32)
    h1 = h1 + jnp.dot(w1c, coords, preferred_element_type=jnp.float32)
    h1 = jnp.maximum(h1, 0.0)                                        # (KC, HW)

    # conv2: block-diagonal matmul over all objects.
    h2 = jnp.dot(w2, h1, preferred_element_type=jnp.float32) + b2
    h2 = jnp.maximum(h2, 0.0)                                        # (KC, HW)

    # conv3 -> sigmoid -> per-object predicted masks.
    logit = jnp.dot(w3, h2, preferred_element_type=jnp.float32) + b3  # (K, HW)
    pred = jax.nn.sigmoid(logit) * mc
    tgt = tgt_ref[0] * mc                                             # (K, HW)

    inter = jnp.sum(pred * tgt)
    sum_p2 = jnp.sum(pred * pred)
    sum_t2 = jnp.sum(tgt * tgt)

    # Single lane-dense (8,128) store per batch: rows 0/1/2 = inter / p2 / t2.
    rows = jax.lax.broadcasted_iota(jnp.int32, (8, 128), 0)
    out_ref[...] = jnp.where(rows == 0, inter,
                   jnp.where(rows == 1, sum_p2,
                   jnp.where(rows == 2, sum_t2, 0.0)))[None, :, :]


@functools.partial(jax.jit, static_argnames=("feat_channel",))
def dice_loss_pallas(seg_feat, conv_weight, mask, ind, target, *, feat_channel):
    f32 = jnp.float32
    B, C, H, W = seg_feat.shape
    assert C == feat_channel
    K = ind.shape[1]
    HW = H * W
    KC = K * C
    D = (C + 2) * C + C + C * C + C + C + 1
    assert conv_weight.shape == (B, D, H, W)
    # TODO(synk): for K*C > 128 the packed slab / block matmuls need an extra
    # object-tiling grid axis; not needed at these shapes.
    assert KC <= 128

    # ---- gather_feature(conv_weight, ind, use_transform=True) ----
    # Gather along the pixel (last) axis; never materialize (B, HW, D).
    cw = conv_weight.reshape(B, D, HW)
    w = jnp.take_along_axis(cw, ind[:, None, :], axis=2)          # (B, D, K)
    w = jnp.transpose(w, (0, 2, 1)).astype(f32)                   # (B, K, D) tiny

    sizes = [(C + 2) * C, C, C * C, C, C, 1]
    splits = list(np.cumsum(sizes))[:-1]
    c1w, c1b, c2w, c2b, c3w, c3b = jnp.split(w, splits, axis=-1)

    W1 = c1w.reshape(B, K, C, C + 2)
    W1f = W1[..., :C]                                             # (B,K,C,C)
    w1x = W1[..., C]                                              # (B,K,C)
    w1y = W1[..., C + 1]                                          # (B,K,C)
    b1 = c1b                                                      # (B,K,C)
    W2 = c2w.reshape(B, K, C, C)
    b2 = c2b                                                      # (B,K,C)
    W3 = c3w                                                      # (B,K,C)
    b3 = c3b                                                      # (B,K,1)

    # Object centers: x = ind % w, y = ind / w.
    # NOTE: modern PyTorch `ind / w` is true division (float y-center); the
    # reference below uses the same semantics.
    xk = (ind % W).astype(f32)
    yk = ind.astype(f32) / float(W)

    # Fold x_rel/y_rel scaling, the per-object center offsets and conv1 bias
    # into the coordinate-weight columns:  pre1 = W1f@seg + ax*xg + ay*yg + c0.
    ax = w1x / float(W)
    ay = w1y / float(H)
    c0 = b1 - ax * xk[:, :, None] - ay * yk[:, :, None]

    eyeK = jnp.eye(K, dtype=f32)
    W1f_all = W1f.reshape(B, KC, C)
    W1c = jnp.pad(jnp.stack([ax, ay, c0], axis=-1),
                  ((0, 0), (0, 0), (0, 0), (0, 5))).reshape(B, KC, 8)
    W2bd = jnp.einsum("bkij,kl->bkilj", W2, eyeK).reshape(B, KC, KC)
    W3blk = jnp.einsum("bkj,kl->bklj", W3, eyeK).reshape(B, K, KC)
    b2col = b2.reshape(B, KC, 1)
    b3col = b3.reshape(B, K, 1)
    mcol = mask.astype(f32).reshape(B, K, 1)

    # ---- pack every per-object parameter into one (B, RP, 128) slab ----
    LP = 128

    def lane_pad(x):
        return jnp.pad(x, ((0, 0), (0, 0), (0, LP - x.shape[-1])))

    pieces = [W1f_all, W1c, W2bd, W3blk, b2col, b3col, mcol]
    offs = []
    r = 0
    for p in pieces:
        offs.append(r)
        r += p.shape[1]
    RP = ((r + 7) // 8) * 8
    P = jnp.concatenate([lane_pad(p) for p in pieces], axis=1)
    if RP != r:
        P = jnp.pad(P, ((0, 0), (0, RP - r), (0, 0)))

    # Shared coordinate plane: [x_grid, y_grid, 1, 0...] on 8 sublanes.
    yg, xg = jnp.meshgrid(jnp.arange(H, dtype=f32), jnp.arange(W, dtype=f32),
                          indexing="ij")
    coords = jnp.concatenate(
        [xg.reshape(1, HW), yg.reshape(1, HW), jnp.ones((1, HW), f32),
         jnp.zeros((5, HW), f32)], axis=0)                          # (8, HW)

    seg = seg_feat.reshape(B, C, HW).astype(f32)                    # (B, C, HW)
    tgt = target.reshape(B, K, HW).astype(f32)                      # (B, K, HW)

    out = pl.pallas_call(
        functools.partial(_dice_kernel, C=C, K=K, offs=tuple(offs)),
        out_shape=jax.ShapeDtypeStruct((B, 8, 128), f32),
        grid_spec=pltpu.PrefetchScalarGridSpec(
            num_scalar_prefetch=0,
            grid=(B,),
            in_specs=[
                pl.BlockSpec((1, C, HW), lambda b: (b, 0, 0)),      # seg feats
                pl.BlockSpec((8, HW), lambda b: (0, 0)),            # coords
                pl.BlockSpec((1, K, HW), lambda b: (b, 0, 0)),      # targets
                pl.BlockSpec((1, RP, LP), lambda b: (b, 0, 0)),     # packed params
            ],
            out_specs=pl.BlockSpec((1, 8, 128), lambda b: (b, 0, 0)),
        ),
        compiler_params=pltpu.CompilerParams(
            dimension_semantics=("parallel",)),
    )(seg, coords, tgt, P)

    inter = out[:, 0, 0]
    sum_p2 = out[:, 1, 0]
    sum_t2 = out[:, 2, 0]
    smooth = 1.0
    loss_per_batch = 1.0 - (2.0 * inter + smooth) / (sum_p2 + sum_t2 + smooth)
    # every batch has K > 0 objects => valid_batch_size == B
    return jnp.sum(loss_per_batch) / B


def _ref_dice_loss(seg_feat, conv_weight, mask, ind, target, C):
    """Pure numpy reference mirroring the PyTorch forward (modern torch: y = ind / w)."""
    seg_feat = np.asarray(seg_feat, np.float32)
    conv_weight = np.asarray(conv_weight, np.float32)
    mask = np.asarray(mask, np.float32)
    ind = np.asarray(ind)
    target = np.asarray(target, np.float32)
    B, _, H, W = seg_feat.shape
    HW = H * W
    D = conv_weight.shape[1]
    K = ind.shape[1]
    cw = conv_weight.reshape(B, D, HW).transpose(0, 2, 1)
    weight = np.take_along_axis(cw, ind[:, :, None], axis=1)
    sizes = [(C + 2) * C, C, C * C, C, C, 1]
    offs = np.cumsum([0] + sizes)
    x = (ind % W).astype(np.float32)
    y = ind.astype(np.float32) / float(W)          # true division, as in modern torch
    yg, xg = np.meshgrid(np.arange(H, dtype=np.float32),
                         np.arange(W, dtype=np.float32), indexing="ij")
    total = 0.0
    for i in range(B):
        wi = weight[i]
        c1w = wi[:, offs[0]:offs[1]].reshape(K, C, C + 2)
        c1b = wi[:, offs[1]:offs[2]]
        c2w = wi[:, offs[2]:offs[3]].reshape(K, C, C)
        c2b = wi[:, offs[3]:offs[4]]
        c3w = wi[:, offs[4]:offs[5]].reshape(K, 1, C)
        c3b = wi[:, offs[5]:offs[6]]
        inter = sp = st = 0.0
        for k in range(K):
            xrel = (xg - x[i, k]) / W
            yrel = (yg - y[i, k]) / H
            xin = np.concatenate([seg_feat[i], xrel[None], yrel[None]],
                                 axis=0).reshape(C + 2, HW)
            h1 = np.maximum(c1w[k] @ xin + c1b[k][:, None], 0.0)
            h2 = np.maximum(c2w[k] @ h1 + c2b[k][:, None], 0.0)
            pred = 1.0 / (1.0 + np.exp(-(c3w[k] @ h2 + c3b[k][:, None])))
            pred = pred.reshape(HW) * mask[i, k]
            tgt = target[i, k].reshape(HW) * mask[i, k]
            inter += float((pred * tgt).sum())
            sp += float((pred * pred).sum())
            st += float((tgt * tgt).sum())
        total += 1.0 - (2.0 * inter + 1.0) / (sp + st + 1.0)
    return total / B


if __name__ == "__main__":
    B, C, H, W, K = 2, 4, 16, 16, 8          # feat_channel = 4
    D = (C + 2) * C + C + C * C + C + C + 1  # = 53

    key = jax.random.PRNGKey(0)
    k1, k2, k3, k4, k5 = jax.random.split(key, 5)
    seg_feat = jax.random.normal(k1, (B, C, H, W), jnp.float32)
    conv_weight = 0.5 * jax.random.normal(k2, (B, D, H, W), jnp.float32)
    ind = jax.random.randint(k3, (B, K), 0, H * W, dtype=jnp.int32)
    mask = jax.random.bernoulli(k4, 0.75, (B, K)).astype(jnp.float32)
    target = jax.random.bernoulli(k5, 0.5, (B, K, H, W)).astype(jnp.float32)

    loss = dice_loss_pallas(seg_feat, conv_weight, mask, ind, target,
                            feat_channel=C)
    loss = jax.block_until_ready(loss)

    ref = _ref_dice_loss(seg_feat, conv_weight, mask, ind, target, C)
    np.testing.assert_allclose(np.asarray(loss), ref, rtol=1e-4, atol=1e-4)

    print("KERNEL_OK")
</pallas_src>

<mosaic_0001>
module attributes {stable_mosaic.version = 11 : i64} {
  func.func @_dice_kernel(%arg0: i32, %arg1: memref<1x4x256xf32, #tpu.memory_space<vmem>>, %arg2: memref<8x256xf32, #tpu.memory_space<vmem>>, %arg3: memref<1x8x256xf32, #tpu.memory_space<vmem>>, %arg4: memref<1x152x128xf32, #tpu.memory_space<vmem>>, %arg5: memref<1x8x128xf32, #tpu.memory_space<vmem>>) attributes {dimension_semantics = [#tpu.dimension_semantics<parallel>], iteration_bounds = array<i64: 2>, scalar_prefetch = 0 : i64, scratch_operands = 0 : i64, tpu.core_type = #tpu.core_type<tc>, window_params = [{transform_indices = @transform_0, window_bounds = array<i64: 1, 4, 256>}, {pipeline_mode = #tpu.pipeline_mode<synchronous>, transform_indices = @transform_1, window_bounds = array<i64: 8, 256>}, {transform_indices = @transform_2, window_bounds = array<i64: 1, 8, 256>}, {transform_indices = @transform_3, window_bounds = array<i64: 1, 152, 128>}, {transform_indices = @transform_4, window_bounds = array<i64: 1, 8, 128>}]} {
    %c0 = arith.constant 0 : index
    %c0_0 = arith.constant 0 : index
    %c0_1 = arith.constant 0 : index
    %0 = vector.load %arg1[%c0, %c0_0, %c0_1] : memref<1x4x256xf32, #tpu.memory_space<vmem>>, vector<1x4x256xf32>
    %1 = vector.shape_cast %0 : vector<1x4x256xf32> to vector<4x256xf32>
    %c0_2 = arith.constant 0 : index
    %c0_3 = arith.constant 0 : index
    %2 = vector.load %arg2[%c0_2, %c0_3] : memref<8x256xf32, #tpu.memory_space<vmem>>, vector<8x256xf32>
    %c0_4 = arith.constant 0 : index
    %c0_5 = arith.constant 0 : index
    %c0_6 = arith.constant 0 : index
    %3 = vector.load %arg4[%c0_4, %c0_5, %c0_6] : memref<1x152x128xf32, #tpu.memory_space<vmem>>, vector<1x32x4xf32>
    %4 = vector.shape_cast %3 : vector<1x32x4xf32> to vector<32x4xf32>
    %c0_7 = arith.constant 0 : index
    %c32 = arith.constant 32 : index
    %c0_8 = arith.constant 0 : index
    %5 = vector.load %arg4[%c0_7, %c32, %c0_8] : memref<1x152x128xf32, #tpu.memory_space<vmem>>, vector<1x32x8xf32>
    %6 = vector.shape_cast %5 : vector<1x32x8xf32> to vector<32x8xf32>
    %c0_9 = arith.constant 0 : index
    %c64 = arith.constant 64 : index
    %c0_10 = arith.constant 0 : index
    %7 = vector.load %arg4[%c0_9, %c64, %c0_10] : memref<1x152x128xf32, #tpu.memory_space<vmem>>, vector<1x32x32xf32>
    %8 = vector.shape_cast %7 : vector<1x32x32xf32> to vector<32x32xf32>
    %c0_11 = arith.constant 0 : index
    %c96 = arith.constant 96 : index
    %c0_12 = arith.constant 0 : index
    %9 = vector.load %arg4[%c0_11, %c96, %c0_12] : memref<1x152x128xf32, #tpu.memory_space<vmem>>, vector<1x8x32xf32>
    %10 = vector.shape_cast %9 : vector<1x8x32xf32> to vector<8x32xf32>
    %c0_13 = arith.constant 0 : index
    %c104 = arith.constant 104 : index
    %c0_14 = arith.constant 0 : index
    %11 = vector.load %arg4[%c0_13, %c104, %c0_14] : memref<1x152x128xf32, #tpu.memory_space<vmem>>, vector<1x32x1xf32>
    %12 = vector.shape_cast %11 : vector<1x32x1xf32> to vector<32x1xf32>
    %c0_15 = arith.constant 0 : index
    %c136 = arith.constant 136 : index
    %c0_16 = arith.constant 0 : index
    %13 = vector.load %arg4[%c0_15, %c136, %c0_16] : memref<1x152x128xf32, #tpu.memory_space<vmem>>, vector<1x8x1xf32>
    %14 = vector.shape_cast %13 : vector<1x8x1xf32> to vector<8x1xf32>
    %c0_17 = arith.constant 0 : index
    %c144 = arith.constant 144 : index
    %c0_18 = arith.constant 0 : index
    %15 = vector.load %arg4[%c0_17, %c144, %c0_18] : memref<1x152x128xf32, #tpu.memory_space<vmem>>, vector<1x8x1xf32>
    %16 = vector.shape_cast %15 : vector<1x8x1xf32> to vector<8x1xf32>
    %cst = arith.constant dense<0.000000e+00> : vector<32x256xf32>
    %17 = tpu.matmul %4, %1, %cst {dimension_numbers = #tpu.dot_dimension_numbers<[1], [0], [0], [1], [0, 0, 1, 1], [], []>} : vector<32x4xf32>, vector<4x256xf32>, vector<32x256xf32> -> vector<32x256xf32>
    %cst_19 = arith.constant dense<0.000000e+00> : vector<32x256xf32>
    %18 = tpu.matmul %6, %2, %cst_19 {dimension_numbers = #tpu.dot_dimension_numbers<[1], [0], [0], [1], [0, 0, 1, 1], [], []>} : vector<32x8xf32>, vector<8x256xf32>, vector<32x256xf32> -> vector<32x256xf32>
    %19 = arith.addf %17, %18 : vector<32x256xf32>
    %cst_20 = arith.constant 0.000000e+00 : f32
    %20 = vector.broadcast %cst_20 : f32 to vector<32x256xf32>
    %21 = arith.maximumf %19, %20 : vector<32x256xf32>
    %cst_21 = arith.constant dense<0.000000e+00> : vector<32x256xf32>
    %22 = tpu.matmul %8, %21, %cst_21 {dimension_numbers = #tpu.dot_dimension_numbers<[1], [0], [0], [1], [0, 0, 1, 1], [], []>} : vector<32x32xf32>, vector<32x256xf32>, vector<32x256xf32> -> vector<32x256xf32>
    %23 = vector.broadcast %12 : vector<32x1xf32> to vector<32x256xf32>
    %24 = arith.addf %22, %23 : vector<32x256xf32>
    %cst_22 = arith.constant 0.000000e+00 : f32
    %25 = vector.broadcast %cst_22 : f32 to vector<32x256xf32>
    %26 = arith.maximumf %24, %25 : vector<32x256xf32>
    %cst_23 = arith.constant dense<0.000000e+00> : vector<8x256xf32>
    %27 = tpu.matmul %10, %26, %cst_23 {dimension_numbers = #tpu.dot_dimension_numbers<[1], [0], [0], [1], [0, 0, 1, 1], [], []>} : vector<8x32xf32>, vector<32x256xf32>, vector<8x256xf32> -> vector<8x256xf32>
    %28 = vector.broadcast %14 : vector<8x1xf32> to vector<8x256xf32>
    %29 = arith.addf %27, %28 : vector<8x256xf32>
    %30 = arith.negf %29 : vector<8x256xf32>
    %31 = math.exp %30 : vector<8x256xf32>
    %cst_24 = arith.constant 1.000000e+00 : f32
    %32 = vector.broadcast %cst_24 : f32 to vector<8x256xf32>
    %33 = arith.addf %32, %31 : vector<8x256xf32>
    %34 = arith.divf %32, %33 : vector<8x256xf32>
    %35 = vector.broadcast %16 : vector<8x1xf32> to vector<8x256xf32>
    %36 = arith.mulf %34, %35 : vector<8x256xf32>
    %c0_25 = arith.constant 0 : index
    %c0_26 = arith.constant 0 : index
    %c0_27 = arith.constant 0 : index
    %37 = vector.load %arg3[%c0_25, %c0_26, %c0_27] : memref<1x8x256xf32, #tpu.memory_space<vmem>>, vector<1x8x256xf32>
    %38 = vector.shape_cast %37 : vector<1x8x256xf32> to vector<8x256xf32>
    %39 = vector.broadcast %16 : vector<8x1xf32> to vector<8x256xf32>
    %40 = arith.mulf %38, %39 : vector<8x256xf32>
    %41 = arith.mulf %36, %40 : vector<8x256xf32>
    %42 = vector.shape_cast %41 : vector<8x256xf32> to vector<1x8x256xf32>
    %cst_28 = arith.constant dense<0.000000e+00> : vector<1xf32>
    %43 = vector.multi_reduction <add>, %42, %cst_28 [1, 2] : vector<1x8x256xf32> to vector<1xf32>
    %44 = vector.shape_cast %43 : vector<1xf32> to vector<1x1x1xf32>
    %45 = vector.extract %44[0, 0, 0] : f32 from vector<1x1x1xf32>
    %46 = arith.mulf %36, %36 : vector<8x256xf32>
    %47 = vector.shape_cast %46 : vector<8x256xf32> to vector<1x8x256xf32>
    %cst_29 = arith.constant dense<0.000000e+00> : vector<1xf32>
    %48 = vector.multi_reduction <add>, %47, %cst_29 [1, 2] : vector<1x8x256xf32> to vector<1xf32>
    %49 = vector.shape_cast %48 : vector<1xf32> to vector<1x1x1xf32>
    %50 = vector.extract %49[0, 0, 0] : f32 from vector<1x1x1xf32>
    %51 = arith.mulf %40, %40 : vector<8x256xf32>
    %52 = vector.shape_cast %51 : vector<8x256xf32> to vector<1x8x256xf32>
    %cst_30 = arith.constant dense<0.000000e+00> : vector<1xf32>
    %53 = vector.multi_reduction <add>, %52, %cst_30 [1, 2] : vector<1x8x256xf32> to vector<1xf32>
    %54 = vector.shape_cast %53 : vector<1xf32> to vector<1x1x1xf32>
    %55 = vector.extract %54[0, 0, 0] : f32 from vector<1x1x1xf32>
    %56 = tpu.iota {dimensions = array<i32: 0>} : vector<8x128xi32>
    %c0_i32 = arith.constant 0 : i32
    %57 = vector.broadcast %c0_i32 : i32 to vector<8x128xi32>
    %58 = arith.cmpi eq, %56, %57 : vector<8x128xi32>
    %c1_i32 = arith.constant 1 : i32
    %59 = vector.broadcast %c1_i32 : i32 to vector<8x128xi32>
    %60 = arith.cmpi eq, %56, %59 : vector<8x128xi32>
    %c2_i32 = arith.constant 2 : i32
    %61 = vector.broadcast %c2_i32 : i32 to vector<8x128xi32>
    %62 = arith.cmpi eq, %56, %61 : vector<8x128xi32>
    %cst_31 = arith.constant 0.000000e+00 : f32
    %63 = vector.broadcast %55 : f32 to vector<8x128xf32>
    %64 = vector.broadcast %cst_31 : f32 to vector<8x128xf32>
    %65 = arith.select %62, %63, %64 : vector<8x128xi1>, vector<8x128xf32>
    %66 = vector.broadcast %50 : f32 to vector<8x128xf32>
    %67 = arith.select %60, %66, %65 : vector<8x128xi1>, vector<8x128xf32>
    %68 = vector.broadcast %45 : f32 to vector<8x128xf32>
    %69 = arith.select %58, %68, %67 : vector<8x128xi1>, vector<8x128xf32>
    %70 = vector.shape_cast %69 : vector<8x128xf32> to vector<1x8x128xf32>
    %c0_32 = arith.constant 0 : index
    %c0_33 = arith.constant 0 : index
    %c0_34 = arith.constant 0 : index
    %71 = vector.load %arg5[%c0_32, %c0_33, %c0_34] : memref<1x8x128xf32, #tpu.memory_space<vmem>>, vector<1x8x128xf32>
    tpu.vector_store %arg5[%c0_32, %c0_33, %c0_34], %70 {strides = array<i32>} : memref<1x8x128xf32, #tpu.memory_space<vmem>>, vector<1x8x128xf32>,
    return
  }
  func.func @transform_0(%arg0: i32) -> (i32, i32, i32) {
    %c0_i32 = arith.constant 0 : i32
    %c0_i32_0 = arith.constant 0 : i32
    %c0_i32_1 = arith.constant 0 : i32
    return %arg0, %c0_i32, %c0_i32_0 : i32, i32, i32
  }
  func.func @transform_1(%arg0: i32) -> (i32, i32) {
    %c0_i32 = arith.constant 0 : i32
    %c0_i32_0 = arith.constant 0 : i32
    %c0_i32_1 = arith.constant 0 : i32
    return %c0_i32, %c0_i32_0 : i32, i32
  }
  func.func @transform_2(%arg0: i32) -> (i32, i32, i32) {
    %c0_i32 = arith.constant 0 : i32
    %c0_i32_0 = arith.constant 0 : i32
    %c0_i32_1 = arith.constant 0 : i32
    return %arg0, %c0_i32, %c0_i32_0 : i32, i32, i32
  }
  func.func @transform_3(%arg0: i32) -> (i32, i32, i32) {
    %c0_i32 = arith.constant 0 : i32
    %c0_i32_0 = arith.constant 0 : i32
    %c0_i32_1 = arith.constant 0 : i32
    return %arg0, %c0_i32, %c0_i32_0 : i32, i32, i32
  }
  func.func @transform_4(%arg0: i32) -> (i32, i32, i32) {
    %c0_i32 = arith.constant 0 : i32
    %c0_i32_0 = arith.constant 0 : i32
    %c0_i32_1 = arith.constant 0 : i32
    return %arg0, %c0_i32, %c0_i32_0 : i32, i32, i32
  }
}

</mosaic_0001>

<llo_original>
// kernel: split.2
$region0: #{split.2}
  #allocation0 [shape = 'u32[2048]{0}', space=vmem, size = 0x2000, scoped, tag = 'scoped memory for split.2']
  #allocation1 [shape = 'u32[2048]{0}', space=vmem, size = 0x2000, scoped, tag = 'scoped memory for split.2']
  #allocation2 [shape = 'u32[2048]{0}', space=vmem, size = 0x2000, scoped, tag = 'scoped memory for split.2']
  #allocation3 [shape = 'u32[2048]{0}', space=vmem, size = 0x2000, scoped, tag = 'scoped memory for split.2']
  #allocation4 [shape = 'u32[2048]{0}', space=vmem, size = 0x2000, scoped, tag = 'scoped memory for split.2']
  #allocation5 [shape = 's32[1]{0}', space=sflag, size = 0x4, scoped, tag = 'scoped memory for split.2']
  %s0 = inlined_call_operand.vmem [shape: f32[2,8,53], index: 0, kind: input, shape index: {}]
  %s1 = inlined_call_operand.vmem [shape: f32[2,8,16], index: 1, kind: output, shape index: {}]
  %v2 = vld [vmem:[%s0] sm:$0xff]
  %v3 = vlaneseq
  %v4 = vand.u32 %v3, 127
  %vm5 = vcmp.lt.s32.totalorder %v4, 28
  %v6 = vsel %vm5, 0, %v2
  %7 = vrot.lane.b32.xlu0 %v6, 100
  %v8 = vpop.permute.xlu0 %7
  %9 = vst [vmem:[%s1] sm:$0xff] %v8
  %s10 = scalar_lea.vmem %s0, 8
  %v11 = vld [vmem:[%s10] sm:$0xff]
  %v12 = vlaneseq
  %v13 = vand.u32 %v12, 127
  %vm14 = vcmp.lt.s32.totalorder %v13, 28
  %v15 = vsel %vm14, 0, %v11
  %16 = vrot.lane.b32.xlu0 %v15, 100
  %v17 = vpop.permute.xlu0 %16
  %s18 = scalar_lea.vmem %s1, 8
  %19 = vst [vmem:[%s18] sm:$0xff] %v17

// kernel: split.5
$region0: #{split.5}
  #allocation0 [shape = 'u32[2048]{0}', space=vmem, size = 0x2000, scoped, tag = 'scoped memory for split.5']
  #allocation1 [shape = 'u32[2048]{0}', space=vmem, size = 0x2000, scoped, tag = 'scoped memory for split.5']
  #allocation2 [shape = 'u32[2048]{0}', space=vmem, size = 0x2000, scoped, tag = 'scoped memory for split.5']
  #allocation3 [shape = 'u32[2048]{0}', space=vmem, size = 0x2000, scoped, tag = 'scoped memory for split.5']
  #allocation4 [shape = 'u32[2048]{0}', space=vmem, size = 0x2000, scoped, tag = 'scoped memory for split.5']
  #allocation5 [shape = 's32[1]{0}', space=sflag, size = 0x4, scoped, tag = 'scoped memory for split.5']
  %s0 = inlined_call_operand.vmem [shape: f32[2,8,53], index: 0, kind: input, shape index: {}]
  %s1 = inlined_call_operand.vmem [shape: f32[2,8,1], index: 1, kind: output, shape index: {}]
  %v2 = vld [vmem:[%s0] sm:$0xff]
  %v3 = vlaneseq
  %v4 = vand.u32 %v3, 127
  %vm5 = vcmp.lt.s32.totalorder %v4, 52
  %v6 = vsel %vm5, 0, %v2
  %7 = vrot.lane.b32.xlu0 %v6, 76
  %v8 = vpop.permute.xlu0 %7
  %9 = vst [vmem:[%s1] sm:$0xff] %v8
  %s10 = scalar_lea.vmem %s0, 8
  %v11 = vld [vmem:[%s10] sm:$0xff]
  %v12 = vlaneseq
  %v13 = vand.u32 %v12, 127
  %vm14 = vcmp.lt.s32.totalorder %v13, 52
  %v15 = vsel %vm14, 0, %v11
  %16 = vrot.lane.b32.xlu0 %v15, 76
  %v17 = vpop.permute.xlu0 %16
  %s18 = scalar_lea.vmem %s1, 8
  %19 = vst [vmem:[%s18] sm:$0xff] %v17

// kernel: dice_loss_pallas.1
$region0: #{dice_loss_pallas.1}
  #allocation0 [shape = 'u32[]', space=smem, size = 0x4, offset = 0x4, fixed_abs, tag = 'smem constant byte address 0x4 - core index']
  #allocation1 [shape = 'u32[144,128]{1,0:T(1,128)}', space=vmem, size = 0x12000, scoped, tag = 'internal scratch']
  %s0 = inlined_call_operand.vmem [shape: f32[2,4,256], index: 0, kind: input, shape index: {}]
  %s1 = inlined_call_operand.vmem [shape: f32[8,256], index: 1, kind: input, shape index: {}]
  %s2 = inlined_call_operand.vmem [shape: f32[2,8,256], index: 2, kind: input, shape index: {}]
  %s3 = inlined_call_operand.vmem [shape: f32[2,152,128], index: 3, kind: input, shape index: {}]
  %s4 = inlined_call_operand.vmem [shape: f32[2,8,128], index: 4, kind: output, shape index: {}]
  %s5 = sld [smem:[#allocation0]]
  $region49: #{dice_loss_pallas.1} parent=0
    _
  %s7 = ssub.s32 1, %s5
  %s8 = scalar_select 0, %s7, %s5
  loop: start=0, step=1, limit=4
  $region2: #{dice_loss_pallas.1} parent=0 // loop_pre_header
    _
  $region3: #{dice_loss_pallas.1} parent=0 // loop_header
    %s10 = sphi 0, %s14
    %p11 = scmp.ge.s32.totalorder %s10, 4
    %s20 = sphi 0, %s22
    %s23 = sphi 0, %s20
    %s24 = sphi 0, %s23
    %s40 = sphi 0, %s24
    %s44 = sphi 0, %s44
    %s46 = sphi 0, %s44
    %s47 = sphi 0, %s46
    %s61 = sphi 0, %s47
    %s67 = sphi 0, %s69
    %s70 = sphi 0, %s67
    %s71 = sphi 0, %s70
    %s87 = sphi 0, %s71
    %s93 = sphi 0, %s95
    %s96 = sphi 0, %s93
    %s97 = sphi 0, %s96
    %s113 = sphi 0, %s97
    %s119 = sphi 0, %s121
    %s122 = sphi 0, %s119
    %s123 = sphi 0, %s122
    %s139 = sphi 0, %s123
  $region4: #{dice_loss_pallas.1} parent=0 // loop_header_branch
    %13 = sbr.rel (%p11) target = $region8
  $region5: #{dice_loss_pallas.1} parent=0 // loop_body
    %s15 = ssub.s32 %s10, 1
    %s16 = ssub.s32 %s10, 2
    %s17 = sadd.s32 %s10, 1
    %s18 = ssub.s32 %s10, %s17
    %p19 = scmp.eq.s32.totalorder %s18, 0
    %s21 = sadd.s32 %s20, 1
    %s22 = scalar_select %p19, %s20, %s21
    %p25 = pneg %p19
    %p26 = scmp.eq.s32.totalorder %s10, 1
    %p27 = por %p25, %p26
    %p28 = scmp.ne.s32.totalorder %s20, %s23
    %p29 = scmp.eq.s32.totalorder %s10, 0
    %p30 = por %p28, %p29
    %p31 = scmp.ne.s32.totalorder %s20, %s23
    %p32 = scmp.eq.s32.totalorder %s15, 1
    %p33 = por %p31, %p32
    %p34 = scmp.ne.s32.totalorder %s23, %s24
    %p35 = scmp.eq.s32.totalorder %s15, 0
    %p36 = por %p34, %p35
    %p37 = scmp.ne.s32.totalorder %s23, %s24
    %p38 = scmp.eq.s32.totalorder %s16, 1
    %p39 = por %p37, %p38
    %p41 = scmp.ne.s32.totalorder %s24, %s40
    %p42 = scmp.eq.s32.totalorder %s16, 0
    %p43 = por %p41, %p42
    %s45 = sadd.s32 %s44, 1
    %p48 = scmp.eq.s32.totalorder %s10, 1
    %p49 = scmp.ne.s32.totalorder %s44, %s46
    %p50 = scmp.eq.s32.totalorder %s10, 0
    %p51 = por %p49, %p50
    %p52 = scmp.ne.s32.totalorder %s44, %s46
    %p53 = scmp.eq.s32.totalorder %s15, 1
    %p54 = por %p52, %p53
    %p55 = scmp.ne.s32.totalorder %s46, %s47
    %p56 = scmp.eq.s32.totalorder %s15, 0
    %p57 = por %p55, %p56
    %p58 = scmp.ne.s32.totalorder %s46, %s47
    %p59 = scmp.eq.s32.totalorder %s16, 1
    %p60 = por %p58, %p59
    %p62 = scmp.ne.s32.totalorder %s47, %s61
    %p63 = scmp.eq.s32.totalorder %s16, 0
    %p64 = por %p62, %p63
    %s65 = ssub.s32 %s10, %s17
    %p66 = scmp.eq.s32.totalorder %s65, 0
    %s68 = sadd.s32 %s67, 1
    %s69 = scalar_select %p66, %s67, %s68
    %p72 = pneg %p66
    %p73 = scmp.eq.s32.totalorder %s10, 1
    %p74 = por %p72, %p73
    %p75 = scmp.ne.s32.totalorder %s67, %s70
    %p76 = scmp.eq.s32.totalorder %s10, 0
    %p77 = por %p75, %p76
    %p78 = scmp.ne.s32.totalorder %s67, %s70
    %p79 = scmp.eq.s32.totalorder %s15, 1
    %p80 = por %p78, %p79
    %p81 = scmp.ne.s32.totalorder %s70, %s71
    %p82 = scmp.eq.s32.totalorder %s15, 0
    %p83 = por %p81, %p82
    %p84 = scmp.ne.s32.totalorder %s70, %s71
    %p85 = scmp.eq.s32.totalorder %s16, 1
    %p86 = por %p84, %p85
    %p88 = scmp.ne.s32.totalorder %s71, %s87
    %p89 = scmp.eq.s32.totalorder %s16, 0
    %p90 = por %p88, %p89
    %s91 = ssub.s32 %s10, %s17
    %p92 = scmp.eq.s32.totalorder %s91, 0
    %s94 = sadd.s32 %s93, 1
    %s95 = scalar_select %p92, %s93, %s94
    %p98 = pneg %p92
    %p99 = scmp.eq.s32.totalorder %s10, 1
    %p100 = por %p98, %p99
    %p101 = scmp.ne.s32.totalorder %s93, %s96
    %p102 = scmp.eq.s32.totalorder %s10, 0
    %p103 = por %p101, %p102
    %p104 = scmp.ne.s32.totalorder %s93, %s96
    %p105 = scmp.eq.s32.totalorder %s15, 1
    %p106 = por %p104, %p105
    %p107 = scmp.ne.s32.totalorder %s96, %s97
    %p108 = scmp.eq.s32.totalorder %s15, 0
    %p109 = por %p107, %p108
    %p110 = scmp.ne.s32.totalorder %s96, %s97
    %p111 = scmp.eq.s32.totalorder %s16, 1
    %p112 = por %p110, %p111
    %p114 = scmp.ne.s32.totalorder %s97, %s113
    %p115 = scmp.eq.s32.totalorder %s16, 0
    %p116 = por %p114, %p115
    %s117 = ssub.s32 %s10, %s17
    %p118 = scmp.eq.s32.totalorder %s117, 0
    %s120 = sadd.s32 %s119, 1
    %s121 = scalar_select %p118, %s119, %s120
    %p124 = pneg %p118
    %p125 = scmp.eq.s32.totalorder %s10, 1
    %p126 = por %p124, %p125
    %p127 = scmp.ne.s32.totalorder %s119, %s122
    %p128 = scmp.eq.s32.totalorder %s10, 0
    %p129 = por %p127, %p128
    %p130 = scmp.ne.s32.totalorder %s119, %s122
    %p131 = scmp.eq.s32.totalorder %s15, 1
    %p132 = por %p130, %p131
    %p133 = scmp.ne.s32.totalorder %s122, %s123
    %p134 = scmp.eq.s32.totalorder %s15, 0
    %p135 = por %p133, %p134
    %p136 = scmp.ne.s32.totalorder %s122, %s123
    %p137 = scmp.eq.s32.totalorder %s16, 1
    %p138 = por %p136, %p137
    %p140 = scmp.ne.s32.totalorder %s123, %s139
    %p141 = scmp.eq.s32.totalorder %s16, 0
    %p142 = por %p140, %p141
    %p143 = scmp.le.s32.totalorder 1, %s10
    %p144 = scmp.lt.s32.totalorder %s10, 3
    %p145 = pnand %p143, %p144
    %p146 = pneg %p145
    // Predicated region
    $region9: #{dice_loss_pallas.1} parent=5 // pred_check
      _
    $region10: #{dice_loss_pallas.1} parent=5 // pred_check_branch
      %148 = sbr.rel (%p145) target = $region12
    $region11: #{dice_loss_pallas.1} parent=5 // pred_region
      %s149 = ssub.s32 %s10, 1
      // Predicated region
      $region13: #{dice_loss_pallas.1} parent=11 // pred_check
        %p150 = pneg %p57
      $region14: #{dice_loss_pallas.1} parent=11 // pred_check_branch
        %152 = sbr.rel (%p150) target = $region16
      $region15: #{dice_loss_pallas.1} parent=11 // pred_region
        _
      $region16: #{dice_loss_pallas.1} parent=11 // pred_fallthru
        _
    $region12: #{dice_loss_pallas.1} parent=5 // pred_fallthru
      _
    %p153 = scmp.lt.s32.totalorder %s10, 2
    // Predicated region
    $region17: #{dice_loss_pallas.1} parent=5 // pred_check
      %p154 = pneg %p153
    $region18: #{dice_loss_pallas.1} parent=5 // pred_check_branch
      %156 = sbr.rel (%p154) target = $region20
    $region19: #{dice_loss_pallas.1} parent=5 // pred_region
      // Predicated region
      $region21: #{dice_loss_pallas.1} parent=19 // pred_check
        %p157 = pneg %p30
      $region22: #{dice_loss_pallas.1} parent=19 // pred_check_branch
        %159 = sbr.rel (%p157) target = $region24
      $region23: #{dice_loss_pallas.1} parent=19 // pred_region
        %p160 = scmp.lt.s32.totalorder %s10, 1
        %s161 = scalar_select %p160, %s10, 1
        %s162 = smul.addr %s161, 2
        %s163 = smul.addr %s162, 4
        %s164 = scalar_lea.vmem %s0, %s163
      $region24: #{dice_loss_pallas.1} parent=19 // pred_fallthru
        _
      // Predicated region
      $region25: #{dice_loss_pallas.1} parent=19 // pred_check
        %p165 = pneg %p77
      $region26: #{dice_loss_pallas.1} parent=19 // pred_check_branch
        %167 = sbr.rel (%p165) target = $region28
      $region27: #{dice_loss_pallas.1} parent=19 // pred_region
        %p168 = scmp.lt.s32.totalorder %s10, 1
        %s169 = scalar_select %p168, %s10, 1
        %s170 = smul.addr %s169, 2
        %s171 = smul.addr %s170, 8
        %s172 = scalar_lea.vmem %s2, %s171
      $region28: #{dice_loss_pallas.1} parent=19 // pred_fallthru
        _
      // Predicated region
      $region29: #{dice_loss_pallas.1} parent=19 // pred_check
        %p173 = pneg %p103
      $region30: #{dice_loss_pallas.1} parent=19 // pred_check_branch
        %175 = sbr.rel (%p173) target = $region32
      $region31: #{dice_loss_pallas.1} parent=19 // pred_region
        %p176 = scmp.lt.s32.totalorder %s10, 1
        %s177 = scalar_select %p176, %s10, 1
        %s178 = smul.addr %s177, 19
        %s179 = smul.addr %s178, 8
        %s180 = scalar_lea.vmem %s3, %s179
      $region32: #{dice_loss_pallas.1} parent=19 // pred_fallthru
        _
    $region20: #{dice_loss_pallas.1} parent=5 // pred_fallthru
      _
    %p181 = scmp.le.s32.totalorder 1, %s10
    %p182 = scmp.lt.s32.totalorder %s10, 3
    %p183 = pnand %p181, %p182
    %p184 = pneg %p183
    // Predicated region
    $region33: #{dice_loss_pallas.1} parent=5 // pred_check
      _
    $region34: #{dice_loss_pallas.1} parent=5 // pred_check_branch
      %186 = sbr.rel (%p183) target = $region36
    $region35: #{dice_loss_pallas.1} parent=5 // pred_region
      %s187 = ssub.s32 %s10, 1
      %p188 = scmp.lt.s32.totalorder %s15, 1
      %s189 = scalar_select %p188, %s15, 1
      %s190 = smul.addr %s189, 2
      %s191 = smul.addr %s190, 4
      %s192 = scalar_lea.vmem %s0, %s191
      %p193 = pneg %p36
      %p194 = pneg %p33
      %p195 = pneg %p57
      %p196 = pneg %p54
      %p197 = scmp.lt.s32.totalorder %s15, 1
      %s198 = scalar_select %p197, %s15, 1
      %s199 = smul.addr %s198, 2
      %s200 = smul.addr %s199, 8
      %s201 = scalar_lea.vmem %s2, %s200
      %p202 = pneg %p83
      %p203 = pneg %p80
      %p204 = scmp.lt.s32.totalorder %s15, 1
      %s205 = scalar_select %p204, %s15, 1
      %s206 = smul.addr %s205, 19
      %s207 = smul.addr %s206, 8
      %s208 = scalar_lea.vmem %s3, %s207
      %p209 = pneg %p109
      %p210 = pneg %p106
      %p211 = pneg %p135
      %p212 = pneg %p132
      %p213 = scmp.lt.s32.totalorder %s15, 1
      %s214 = scalar_select %p213, %s15, 1
      %s215 = smul.addr %s214, 8
      %s216 = scalar_lea.vmem %s4, %s215
      %p217 = scmp.lt.s32.totalorder %s15, 1
      %s218 = scalar_select %p217, %s15, 1
      %s219 = smul.addr %s218, 2
      %s220 = smul.addr %s219, 4
      %s221 = scalar_lea.vmem %s0, %s220
      %p222 = scmp.lt.s32.totalorder %s15, 1
      %s223 = scalar_select %p222, %s15, 1
      %s224 = smul.addr %s223, 2
      %s225 = smul.addr %s224, 8
      %s226 = scalar_lea.vmem %s2, %s225
      %p227 = scmp.lt.s32.totalorder %s15, 1
      %s228 = scalar_select %p227, %s15, 1
      %s229 = smul.addr %s228, 19
      %s230 = smul.addr %s229, 8
      %s231 = scalar_lea.vmem %s3, %s230
      %p232 = scmp.lt.s32.totalorder %s15, 1
      %s233 = scalar_select %p232, %s15, 1
      %s234 = smul.addr %s233, 8
      %s235 = scalar_lea.vmem %s4, %s234
      %v236 = vld [vmem:[%s221] sm:$0xff]
      %v237 = vld [vmem:[%s1] sm:$0xff]
      %v238 = vld [vmem:[%s1 + $0x8] sm:$0xff]
      %v239 = vld [vmem:[%s231] sm:$0xff]
      %v240 = vld [vmem:[%s231 + $0x8] sm:$0xff]
      %v241 = vld [vmem:[%s231 + $0x10] sm:$0xff]
      %v242 = vld [vmem:[%s231 + $0x18] sm:$0xff]
      %v243 = vld [vmem:[%s231 + $0x20] sm:$0xff]
      %v244 = vld [vmem:[%s231 + $0x28] sm:$0xff]
      %v245 = vld [vmem:[%s231 + $0x30] sm:$0xff]
      %v246 = vld [vmem:[%s231 + $0x38] sm:$0xff]
      %v247 = vld [vmem:[%s231 + $0x40] sm:$0xff]
      %v248 = vld [vmem:[%s231 + $0x48] sm:$0xff]
      %v249 = vld [vmem:[%s231 + $0x50] sm:$0xff]
      %v250 = vld [vmem:[%s231 + $0x58] sm:$0xff]
      %v251 = vld [vmem:[%s231 + $0x60] sm:$0xff]
      %v252 = vld [vmem:[%s231 + $0x68] sm:$0xff]
      %v253 = vld [vmem:[%s231 + $0x70] sm:$0xff]
      %v254 = vld [vmem:[%s231 + $0x78] sm:$0xff]
      %v255 = vld [vmem:[%s231 + $0x80] sm:$0xff]
      %v256 = vld [vmem:[%s231 + $0x88] sm:$0xff]
      %v257 = vld [vmem:[%s231 + $0x90] sm:$0xff]
      %vm258 = vcmask 64512
      %v260 = vsel %vm258, %v243, 0
      %v263 = vsel %vm258, %v244, 0
      %v266 = vsel %vm258, %v245, 0
      %v269 = vsel %vm258, %v246, 0
      %271 = vmatprep.subr.mxu0 %v238
      %272 = vmatpush1.msra.mxu0 %v237
      %273 = vmatprep.subr.mxu0 0.0
      %274 = vmatpush1.msra.mxu0 0.0
      %275 = vmatprep.subr.mxu0 0.0
      %276 = vmatpush1.msra.mxu0 0.0
      %277 = vmatprep.subr.mxu0 0.0
      %278 = vmatpush1.msra.mxu0 0.0
      %279 = vmatprep.subr.mxu0 0.0
      %280 = vmatpush1.msra.mxu0 0.0
      %281 = vmatprep.subr.mxu0 0.0
      %282 = vmatpush1.msra.mxu0 0.0
      %283 = vmatprep.subr.mxu0 0.0
      %284 = vmatpush1.msra.mxu0 0.0
      %285 = vmatprep.subr.mxu0 0.0
      %286 = vmatpush1.msra.mxu0 0.0
      %287 = vmatprep.subr.mxu0 0.0
      %288 = vmatpush1.msra.mxu0 0.0
      %289 = vmatprep.subr.mxu0 0.0
      %290 = vmatpush1.msra.mxu0 0.0
      %291 = vmatprep.subr.mxu0 0.0
      %292 = vmatpush1.msra.mxu0 0.0
      %293 = vmatprep.subr.mxu0 0.0
      %294 = vmatpush1.msra.mxu0 0.0
      %295 = vmatprep.subr.mxu0 0.0
      %296 = vmatpush1.msra.mxu0 0.0
      %297 = vmatprep.subr.mxu0 0.0
      %298 = vmatpush1.msra.mxu0 0.0
      %299 = vmatprep.subr.mxu0 0.0
      %300 = vmatpush1.msra.mxu0 0.0
      %301 = vmatprep.subr.mxu0 0.0
      %302 = vmatpush1.msra.mxu0 0.0
      %303 = vmatprep.subr.mxu0 0.0
      %304 = vmatpush1.msra.mxu0 0.0
      %305 = vmatprep.subr.mxu0 0.0
      %306 = vmatpush1.msra.mxu0 0.0
      %307 = vmatprep.subr.mxu0 0.0
      %308 = vmatpush1.msra.mxu0 0.0
      %309 = vmatprep.subr.mxu0 0.0
      %310 = vmatpush1.msra.mxu0 0.0
      %311 = vmatprep.subr.mxu0 0.0
      %312 = vmatpush1.msra.mxu0 0.0
      %313 = vmatprep.subr.mxu0 0.0
      %314 = vmatpush1.msra.mxu0 0.0
      %315 = vmatprep.subr.mxu0 0.0
      %316 = vmatpush1.msra.mxu0 0.0
      %317 = vmatprep.subr.mxu0 0.0
      %318 = vmatpush1.msra.mxu0 0.0
      %319 = vmatprep.subr.mxu0 0.0
      %320 = vmatpush1.msra.mxu0 0.0
      %321 = vmatprep.subr.mxu0 0.0
      %322 = vmatpush1.msra.mxu0 0.0
      %323 = vmatprep.subr.mxu0 0.0
      %324 = vmatpush1.msra.mxu0 0.0
      %325 = vmatprep.subr.mxu0 0.0
      %326 = vmatpush1.msra.mxu0 0.0
      %327 = vmatprep.subr.mxu0 0.0
      %328 = vmatpush1.msra.mxu0 0.0
      %329 = vmatprep.subr.mxu0 0.0
      %330 = vmatpush1.msra.mxu0 0.0
      %331 = vmatprep.subr.mxu0 0.0
      %332 = vmatpush1.msra.mxu0 0.0
      %333 = vmatprep.subr.mxu0 0.0
      %334 = vmatpush1.msra.mxu0 0.0
      %335 = vmatprep.mubr.f32.mxu0 0.0
      %336 = vmatmul.mubr.f32.gmra.mrb[0].mxu0 %v260
      %v337 = vpop.f32.mrb[0].mxu0
      %v338 = vadd.f32 0.0, %v337
      %v339 = vpop.f32.mrb[0].mxu0
      %v340 = vadd.f32 0.0, %v339
      %341 = vmatprep.mubr.f32.mxu0 0.0
      %342 = vmatmul.mubr.f32.gmra.mrb[0].mxu0 %v263
      %v343 = vpop.f32.mrb[0].mxu0
      %v344 = vadd.f32 0.0, %v343
      %v345 = vpop.f32.mrb[0].mxu0
      %v346 = vadd.f32 0.0, %v345
      %347 = vmatprep.mubr.f32.mxu0 0.0
      %348 = vmatmul.mubr.f32.gmra.mrb[0].mxu0 %v266
      %v349 = vpop.f32.mrb[0].mxu0
      %v350 = vadd.f32 0.0, %v349
      %v351 = vpop.f32.mrb[0].mxu0
      %v352 = vadd.f32 0.0, %v351
      %353 = vmatprep.mubr.f32.mxu0 0.0
      %354 = vmatmul.mubr.f32.gmra.mrb[0].mxu0 %v269
      %v355 = vpop.f32.mrb[0].mxu0
      %v356 = vadd.f32 0.0, %v355
      %v357 = vpop.f32.mrb[0].mxu0
      %v358 = vadd.f32 0.0, %v357
      %359 = vdwg.mxu0
      %v361 = vcombine.high %v236, %v236
      %vm362 = vcmask 31744
      %v364 = vsel %vm362, %v239, 0
      %v367 = vsel %vm362, %v240, 0
      %v370 = vsel %vm362, %v241, 0
      %v373 = vsel %vm362, %v242, 0
      %vm375 = vcmask 1043456
      %v376 = vsel %vm375, %v236, 0
      %v378 = vsel %vm375, %v361, 0
      %380 = vmatprep.subr.mxu0 %v378
      %381 = vmatpush1.msra.mxu0 %v376
      %382 = vmatprep.subr.mxu0 0.0
      %383 = vmatpush1.msra.mxu0 0.0
      %384 = vmatprep.subr.mxu0 0.0
      %385 = vmatpush1.msra.mxu0 0.0
      %386 = vmatprep.subr.mxu0 0.0
      %387 = vmatpush1.msra.mxu0 0.0
      %388 = vmatprep.subr.mxu0 0.0
      %389 = vmatpush1.msra.mxu0 0.0
      %390 = vmatprep.subr.mxu0 0.0
      %391 = vmatpush1.msra.mxu0 0.0
      %392 = vmatprep.subr.mxu0 0.0
      %393 = vmatpush1.msra.mxu0 0.0
      %394 = vmatprep.subr.mxu0 0.0
      %395 = vmatpush1.msra.mxu0 0.0
      %396 = vmatprep.subr.mxu0 0.0
      %397 = vmatpush1.msra.mxu0 0.0
      %398 = vmatprep.subr.mxu0 0.0
      %399 = vmatpush1.msra.mxu0 0.0
      %400 = vmatprep.subr.mxu0 0.0
      %401 = vmatpush1.msra.mxu0 0.0
      %402 = vmatprep.subr.mxu0 0.0
      %403 = vmatpush1.msra.mxu0 0.0
      %404 = vmatprep.subr.mxu0 0.0
      %405 = vmatpush1.msra.mxu0 0.0
      %406 = vmatprep.subr.mxu0 0.0
      %407 = vmatpush1.msra.mxu0 0.0
      %408 = vmatprep.subr.mxu0 0.0
      %409 = vmatpush1.msra.mxu0 0.0
      %410 = vmatprep.subr.mxu0 0.0
      %411 = vmatpush1.msra.mxu0 0.0
      %412 = vmatprep.subr.mxu0 0.0
      %413 = vmatpush1.msra.mxu0 0.0
      %414 = vmatprep.subr.mxu0 0.0
      %415 = vmatpush1.msra.mxu0 0.0
      %416 = vmatprep.subr.mxu0 0.0
      %417 = vmatpush1.msra.mxu0 0.0
      %418 = vmatprep.subr.mxu0 0.0
      %419 = vmatpush1.msra.mxu0 0.0
      %420 = vmatprep.subr.mxu0 0.0
      %421 = vmatpush1.msra.mxu0 0.0
      %422 = vmatprep.subr.mxu0 0.0
      %423 = vmatpush1.msra.mxu0 0.0
      %424 = vmatprep.subr.mxu0 0.0
      %425 = vmatpush1.msra.mxu0 0.0
      %426 = vmatprep.subr.mxu0 0.0
      %427 = vmatpush1.msra.mxu0 0.0
      %428 = vmatprep.subr.mxu0 0.0
      %429 = vmatpush1.msra.mxu0 0.0
      %430 = vmatprep.subr.mxu0 0.0
      %431 = vmatpush1.msra.mxu0 0.0
      %432 = vmatprep.subr.mxu0 0.0
      %433 = vmatpush1.msra.mxu0 0.0
      %434 = vmatprep.subr.mxu0 0.0
      %435 = vmatpush1.msra.mxu0 0.0
      %436 = vmatprep.subr.mxu0 0.0
      %437 = vmatpush1.msra.mxu0 0.0
      %438 = vmatprep.subr.mxu0 0.0
      %439 = vmatpush1.msra.mxu0 0.0
      %440 = vmatprep.subr.mxu0 0.0
      %441 = vmatpush1.msra.mxu0 0.0
      %442 = vmatprep.subr.mxu0 0.0
      %443 = vmatpush1.msra.mxu0 0.0
      %444 = vmatprep.mubr.f32.mxu0 0.0
      %445 = vmatmul.mubr.f32.gmra.mrb[0].mxu0 %v364
      %v446 = vpop.f32.mrb[0].mxu0
      %v447 = vadd.f32 %v338, %v446
      %v448 = vpop.f32.mrb[0].mxu0
      %v449 = vadd.f32 %v340, %v448
      %450 = vmatprep.mubr.f32.mxu0 0.0
      %451 = vmatmul.mubr.f32.gmra.mrb[0].mxu0 %v367
      %v452 = vpop.f32.mrb[0].mxu0
      %v453 = vadd.f32 %v344, %v452
      %v454 = vpop.f32.mrb[0].mxu0
      %v455 = vadd.f32 %v346, %v454
      %456 = vmatprep.mubr.f32.mxu0 0.0
      %457 = vmatmul.mubr.f32.gmra.mrb[0].mxu0 %v370
      %v458 = vpop.f32.mrb[0].mxu0
      %v459 = vadd.f32 %v350, %v458
      %v460 = vpop.f32.mrb[0].mxu0
      %v461 = vadd.f32 %v352, %v460
      %462 = vmatprep.mubr.f32.mxu0 0.0
      %463 = vmatmul.mubr.f32.gmra.mrb[0].mxu0 %v373
      %v464 = vpop.f32.mrb[0].mxu0
      %v465 = vadd.f32 %v356, %v464
      %v466 = vpop.f32.mrb[0].mxu0
      %v467 = vadd.f32 %v358, %v466
      %468 = vdwg.mxu0
      %v469 = vmax.f32 %v447, 0.0
      %v470 = vmax.f32 %v449, 0.0
      %v471 = vmax.f32 %v453, 0.0
      %v472 = vmax.f32 %v455, 0.0
      %v473 = vmax.f32 %v459, 0.0
      %v474 = vmax.f32 %v461, 0.0
      %v475 = vmax.f32 %v465, 0.0
      %v476 = vmax.f32 %v467, 0.0
      %478 = vset.pattern.permute.xlu0 0
      %479 = vperm.xlu0 %478, %v252
      %v480 = vpop.permute.xlu0 %479
      %483 = vset.pattern.permute.xlu0 0
      %484 = vperm.xlu0 %483, %v253
      %v485 = vpop.permute.xlu0 %484
      %488 = vset.pattern.permute.xlu0 0
      %489 = vperm.xlu0 %488, %v254
      %v490 = vpop.permute.xlu0 %489
      %493 = vset.pattern.permute.xlu0 0
      %494 = vperm.xlu0 %493, %v255
      %v495 = vpop.permute.xlu0 %494
      %vm497 = vcmask 261120
      %v499 = vsel %vm497, %v247, 0
      %v502 = vsel %vm497, %v248, 0
      %v505 = vsel %vm497, %v249, 0
      %v508 = vsel %vm497, %v250, 0
      %510 = vmatprep.subr.mxu0 %v470
      %511 = vmatpush1.msra.mxu0 %v469
      %512 = vmatprep.subr.mxu0 %v472
      %513 = vmatpush1.msra.mxu0 %v471
      %514 = vmatprep.subr.mxu0 %v474
      %515 = vmatpush1.msra.mxu0 %v473
      %516 = vmatprep.subr.mxu0 %v476
      %517 = vmatpush1.msra.mxu0 %v475
      %518 = vmatprep.subr.mxu0 0.0
      %519 = vmatpush1.msra.mxu0 0.0
      %520 = vmatprep.subr.mxu0 0.0
      %521 = vmatpush1.msra.mxu0 0.0
      %522 = vmatprep.subr.mxu0 0.0
      %523 = vmatpush1.msra.mxu0 0.0
      %524 = vmatprep.subr.mxu0 0.0
      %525 = vmatpush1.msra.mxu0 0.0
      %526 = vmatprep.subr.mxu0 0.0
      %527 = vmatpush1.msra.mxu0 0.0
      %528 = vmatprep.subr.mxu0 0.0
      %529 = vmatpush1.msra.mxu0 0.0
      %530 = vmatprep.subr.mxu0 0.0
      %531 = vmatpush1.msra.mxu0 0.0
      %532 = vmatprep.subr.mxu0 0.0
      %533 = vmatpush1.msra.mxu0 0.0
      %534 = vmatprep.subr.mxu0 0.0
      %535 = vmatpush1.msra.mxu0 0.0
      %536 = vmatprep.subr.mxu0 0.0
      %537 = vmatpush1.msra.mxu0 0.0
      %538 = vmatprep.subr.mxu0 0.0
      %539 = vmatpush1.msra.mxu0 0.0
      %540 = vmatprep.subr.mxu0 0.0
      %541 = vmatpush1.msra.mxu0 0.0
      %542 = vmatprep.subr.mxu0 0.0
      %543 = vmatpush1.msra.mxu0 0.0
      %544 = vmatprep.subr.mxu0 0.0
      %545 = vmatpush1.msra.mxu0 0.0
      %546 = vmatprep.subr.mxu0 0.0
      %547 = vmatpush1.msra.mxu0 0.0
      %548 = vmatprep.subr.mxu0 0.0
      %549 = vmatpush1.msra.mxu0 0.0
      %550 = vmatprep.subr.mxu0 0.0
      %551 = vmatpush1.msra.mxu0 0.0
      %552 = vmatprep.subr.mxu0 0.0
      %553 = vmatpush1.msra.mxu0 0.0
      %554 = vmatprep.subr.mxu0 0.0
      %555 = vmatpush1.msra.mxu0 0.0
      %556 = vmatprep.subr.mxu0 0.0
      %557 = vmatpush1.msra.mxu0 0.0
      %558 = vmatprep.subr.mxu0 0.0
      %559 = vmatpush1.msra.mxu0 0.0
      %560 = vmatprep.subr.mxu0 0.0
      %561 = vmatpush1.msra.mxu0 0.0
      %562 = vmatprep.subr.mxu0 0.0
      %563 = vmatpush1.msra.mxu0 0.0
      %564 = vmatprep.subr.mxu0 0.0
      %565 = vmatpush1.msra.mxu0 0.0
      %566 = vmatprep.subr.mxu0 0.0
      %567 = vmatpush1.msra.mxu0 0.0
      %568 = vmatprep.subr.mxu0 0.0
      %569 = vmatpush1.msra.mxu0 0.0
      %570 = vmatprep.subr.mxu0 0.0
      %571 = vmatpush1.msra.mxu0 0.0
      %572 = vmatprep.subr.mxu0 0.0
      %573 = vmatpush1.msra.mxu0 0.0
      %574 = vmatprep.mubr.f32.mxu0 0.0
      %575 = vmatmul.mubr.f32.gmra.mrb[0].mxu0 %v499
      %v576 = vpop.f32.mrb[0].mxu0
      %v577 = vadd.f32 %v480, %v576
      %v578 = vpop.f32.mrb[0].mxu0
      %v579 = vadd.f32 %v480, %v578
      %580 = vmatprep.mubr.f32.mxu0 0.0
      %581 = vmatmul.mubr.f32.gmra.mrb[0].mxu0 %v502
      %v582 = vpop.f32.mrb[0].mxu0
      %v583 = vadd.f32 %v485, %v582
      %v584 = vpop.f32.mrb[0].mxu0
      %v585 = vadd.f32 %v485, %v584
      %586 = vmatprep.mubr.f32.mxu0 0.0
      %587 = vmatmul.mubr.f32.gmra.mrb[0].mxu0 %v505
      %v588 = vpop.f32.mrb[0].mxu0
      %v589 = vadd.f32 %v490, %v588
      %v590 = vpop.f32.mrb[0].mxu0
      %v591 = vadd.f32 %v490, %v590
      %592 = vmatprep.mubr.f32.mxu0 0.0
      %593 = vmatmul.mubr.f32.gmra.mrb[0].mxu0 %v508
      %v594 = vpop.f32.mrb[0].mxu0
      %v595 = vadd.f32 %v495, %v594
      %v596 = vpop.f32.mrb[0].mxu0
      %v597 = vadd.f32 %v495, %v596
      %598 = vdwg.mxu0
      %v599 = vmax.f32 %v577, 0.0
      %v600 = vmax.f32 %v579, 0.0
      %v601 = vmax.f32 %v583, 0.0
      %v602 = vmax.f32 %v585, 0.0
      %v603 = vmax.f32 %v589, 0.0
      %v604 = vmax.f32 %v591, 0.0
      %v605 = vmax.f32 %v595, 0.0
      %v606 = vmax.f32 %v597, 0.0
      %608 = vset.pattern.permute.xlu0 0
      %609 = vperm.xlu0 %608, %v256
      %v610 = vpop.permute.xlu0 %609
      %v613 = vsel %vm497, %v251, 0
      %615 = vmatprep.subr.mxu0 %v600
      %616 = vmatpush1.msra.mxu0 %v599
      %617 = vmatprep.subr.mxu0 %v602
      %618 = vmatpush1.msra.mxu0 %v601
      %619 = vmatprep.subr.mxu0 %v604
      %620 = vmatpush1.msra.mxu0 %v603
      %621 = vmatprep.subr.mxu0 %v606
      %622 = vmatpush1.msra.mxu0 %v605
      %623 = vmatprep.subr.mxu0 0.0
      %624 = vmatpush1.msra.mxu0 0.0
      %625 = vmatprep.subr.mxu0 0.0
      %626 = vmatpush1.msra.mxu0 0.0
      %627 = vmatprep.subr.mxu0 0.0
      %628 = vmatpush1.msra.mxu0 0.0
      %629 = vmatprep.subr.mxu0 0.0
      %630 = vmatpush1.msra.mxu0 0.0
      %631 = vmatprep.subr.mxu0 0.0
      %632 = vmatpush1.msra.mxu0 0.0
      %633 = vmatprep.subr.mxu0 0.0
      %634 = vmatpush1.msra.mxu0 0.0
      %635 = vmatprep.subr.mxu0 0.0
      %636 = vmatpush1.msra.mxu0 0.0
      %637 = vmatprep.subr.mxu0 0.0
      %638 = vmatpush1.msra.mxu0 0.0
      %639 = vmatprep.subr.mxu0 0.0
      %640 = vmatpush1.msra.mxu0 0.0
      %641 = vmatprep.subr.mxu0 0.0
      %642 = vmatpush1.msra.mxu0 0.0
      %643 = vmatprep.subr.mxu0 0.0
      %644 = vmatpush1.msra.mxu0 0.0
      %645 = vmatprep.subr.mxu0 0.0
      %646 = vmatpush1.msra.mxu0 0.0
      %647 = vmatprep.subr.mxu0 0.0
      %648 = vmatpush1.msra.mxu0 0.0
      %649 = vmatprep.subr.mxu0 0.0
      %650 = vmatpush1.msra.mxu0 0.0
      %651 = vmatprep.subr.mxu0 0.0
      %652 = vmatpush1.msra.mxu0 0.0
      %653 = vmatprep.subr.mxu0 0.0
      %654 = vmatpush1.msra.mxu0 0.0
      %655 = vmatprep.subr.mxu0 0.0
      %656 = vmatpush1.msra.mxu0 0.0
      %657 = vmatprep.subr.mxu0 0.0
      %658 = vmatpush1.msra.mxu0 0.0
      %659 = vmatprep.subr.mxu0 0.0
      %660 = vmatpush1.msra.mxu0 0.0
      %661 = vmatprep.subr.mxu0 0.0
      %662 = vmatpush1.msra.mxu0 0.0
      %663 = vmatprep.subr.mxu0 0.0
      %664 = vmatpush1.msra.mxu0 0.0
      %665 = vmatprep.subr.mxu0 0.0
      %666 = vmatpush1.msra.mxu0 0.0
      %667 = vmatprep.subr.mxu0 0.0
      %668 = vmatpush1.msra.mxu0 0.0
      %669 = vmatprep.subr.mxu0 0.0
      %670 = vmatpush1.msra.mxu0 0.0
      %671 = vmatprep.subr.mxu0 0.0
      %672 = vmatpush1.msra.mxu0 0.0
      %673 = vmatprep.subr.mxu0 0.0
      %674 = vmatpush1.msra.mxu0 0.0
      %675 = vmatprep.subr.mxu0 0.0
      %676 = vmatpush1.msra.mxu0 0.0
      %677 = vmatprep.subr.mxu0 0.0
      %678 = vmatpush1.msra.mxu0 0.0
      %679 = vmatprep.mubr.f32.mxu0 0.0
      %680 = vmatmul.mubr.f32.gmra.mrb[0].mxu0 %v613
      %v681 = vpop.f32.mrb[0].mxu0
      %v682 = vadd.f32 %v610, %v681
      %v683 = vpop.f32.mrb[0].mxu0
      %v684 = vadd.f32 %v610, %v683
      %685 = vdwg.mxu0
      %v686 = vxor.u32 %v682, 2147483648
      %v687 = vxor.u32 %v684, 2147483648
      %v688 = vmul.f32 %v686, 1.442695
      %v689 = vpow.pop %v688
      %v690 = vmul.f32 %v687, 1.442695
      %v691 = vpow.pop %v690
      %v692 = vadd.f32 %v689, 1.0
      %v693 = vadd.f32 %v691, 1.0
      %v694 = vrcp.pop %v692
      %v695 = vmul.f32 1.0, %v694
      %v696 = vrcp.pop %v693
      %v697 = vmul.f32 1.0, %v696
      %699 = vset.pattern.permute.xlu0 0
      %700 = vperm.xlu0 %699, %v257
      %v701 = vpop.permute.xlu0 %700
      %v703 = vmul.f32 %v695, %v701
      %v704 = vmul.f32 %v697, %v701
      %v705 = vld [vmem:[%s226] sm:$0xff]
      %v706 = vld [vmem:[%s226 + $0x8] sm:$0xff]
      %v707 = vmul.f32 %v705, %v701
      %v708 = vmul.f32 %v706, %v701
      %v709 = vmul.f32 %v703, %v707
      %v710 = vmul.f32 %v704, %v708
      %v711 = vadd.f32 %v709, %v710
      %712 = vadd.xlane.f32.xlu0 %v711
      %v713 = vpop.xlane.xlu0 %712
      %v714 = vrot.slane %v713, 4
      %v715 = vadd.f32 %v713, %v714
      %v716 = vrot.slane %v715, 2
      %v717 = vadd.f32 %v715, %v716
      %v718 = vrot.slane %v717, 1
      %v719 = vadd.f32 %v717, %v718
      %s720 = vtos %v719
      %v721 = vmul.f32 %v703, %v703
      %v722 = vmul.f32 %v704, %v704
      %v723 = vadd.f32 %v721, %v722
      %724 = vadd.xlane.f32.xlu0 %v723
      %v725 = vpop.xlane.xlu0 %724
      %v726 = vrot.slane %v725, 4
      %v727 = vadd.f32 %v725, %v726
      %v728 = vrot.slane %v727, 2
      %v729 = vadd.f32 %v727, %v728
      %v730 = vrot.slane %v729, 1
      %v731 = vadd.f32 %v729, %v730
      %s732 = vtos %v731
      %v733 = vmul.f32 %v707, %v707
      %v734 = vmul.f32 %v708, %v708
      %v735 = vadd.f32 %v733, %v734
      %736 = vadd.xlane.f32.xlu0 %v735
      %v737 = vpop.xlane.xlu0 %736
      %v738 = vrot.slane %v737, 4
      %v739 = vadd.f32 %v737, %v738
      %v740 = vrot.slane %v739, 2
      %v741 = vadd.f32 %v739, %v740
      %v742 = vrot.slane %v741, 1
      %v743 = vadd.f32 %v741, %v742
      %s744 = vtos %v743
      %v745 = vlaneseq
      %v746 = vshrl.u32 %v745, 7
      %vm747 = vcmp.eq.s32.totalorder %v746, 0
      %vm748 = vcmp.eq.s32.totalorder %v746, 1
      %vm749 = vcmp.eq.s32.totalorder %v746, 2
      %v750 = vstv %s744
      %v751 = vsel %vm749, %v750, 0.0
      %v752 = vstv %s732
      %v753 = vsel %vm748, %v752, %v751
      %v754 = vstv %s720
      %v755 = vsel %vm747, %v754, %v753
      %756 = vst [vmem:[%s235] sm:$0xff] %v755
      %p757 = scmp.lt.s32.totalorder %s15, 1
      %s758 = scalar_select %p757, %s15, 1
      %s759 = smul.addr %s758, 8
      %s760 = scalar_lea.vmem %s4, %s759
      // Predicated region
      $region37: #{dice_loss_pallas.1} parent=35 // pred_check
        %p761 = pneg %p132
      $region38: #{dice_loss_pallas.1} parent=35 // pred_check_branch
        %763 = sbr.rel (%p761) target = $region40
      $region39: #{dice_loss_pallas.1} parent=35 // pred_region
        _
      $region40: #{dice_loss_pallas.1} parent=35 // pred_fallthru
        _
    $region36: #{dice_loss_pallas.1} parent=5 // pred_fallthru
      _
    %p764 = scmp.le.s32.totalorder 2, %s10
    // Predicated region
    $region41: #{dice_loss_pallas.1} parent=5 // pred_check
      %p765 = pneg %p764
    $region42: #{dice_loss_pallas.1} parent=5 // pred_check_branch
      %767 = sbr.rel (%p765) target = $region44
    $region43: #{dice_loss_pallas.1} parent=5 // pred_region
      %s768 = ssub.s32 %s10, 2
      // Predicated region
      $region45: #{dice_loss_pallas.1} parent=43 // pred_check
        %p769 = pneg %p138
      $region46: #{dice_loss_pallas.1} parent=43 // pred_check_branch
        %771 = sbr.rel (%p769) target = $region48
      $region47: #{dice_loss_pallas.1} parent=43 // pred_region
        %p772 = scmp.lt.s32.totalorder %s16, 1
        %s773 = scalar_select %p772, %s16, 1
        %s774 = smul.addr %s773, 8
        %s775 = scalar_lea.vmem %s4, %s774
      $region48: #{dice_loss_pallas.1} parent=43 // pred_fallthru
        _
    $region44: #{dice_loss_pallas.1} parent=5 // pred_fallthru
      _
  $region6: #{dice_loss_pallas.1} parent=0 // loop_footer
    %s14 = sadd.s32 1, %s10
  $region7: #{dice_loss_pallas.1} parent=0 // loop_footer_branch
    %9 = sbr.rel target = $region3
  $region8: #{dice_loss_pallas.1} parent=0 // loop_exit
    _

</llo_original>
